<compile_context>
chip_gen: v7x
topology: tpu7x:2x2x1
jax: 0.10.0
libtpu: 0.0.40
codegen_flags: <defaults>
</compile_context>

<pallas_src>
import functools

import jax
import jax.numpy as jnp
from jax.experimental import pallas as pl
from jax.experimental.pallas import tpu as pltpu


# Below this many elements, fused XLA beats kernel-launch + per-step overhead.
_FAST_PATH_ELEMS = 64 * 1024
# Per input VMEM buffer budget (the pipeline double-buffers -> 2x this).
_DEFAULT_BLOCK_BYTES = 4 * 1024 * 1024
# Feature-axis tile cap: 2048 f32 lanes = 8 KiB contiguous per row segment.
_MAX_TC = 2048


def _moments_kernel(x_ref, sum_ref, sq_ref, *, rows_per_slice, tile_rows,
                    acc_rows):
    """grid = (n_par, c_blocks, n_tiles); the reduction axis (n_tiles) is last.

    x_ref   : (tile_rows, tc) input tile in its native dtype.
    sum_ref : (1, acc_rows, tc) f32 output block, revisited across the k sweep
              and used directly as the running accumulator of sum(x).
    sq_ref  : (1, acc_rows, tc) f32 running accumulator of sum(x*x).
    """
    k = pl.program_id(2)
    nk = pl.num_programs(2)

    @pl.when(k == 0)
    def _init():
        sum_ref[...] = jnp.zeros_like(sum_ref)
        sq_ref[...] = jnp.zeros_like(sq_ref)

    x = x_ref[...].astype(jnp.float32)

    def accumulate(v):
        # Keep `acc_rows` sublane strips inside the streaming loop (VALU adds
        # only); the single cross-sublane fold is done once, in the wrapper.
        if acc_rows > 1:
            vr = v.reshape(tile_rows // acc_rows, acc_rows, v.shape[-1])
            s = vr.sum(axis=0)
            q = (vr * vr).sum(axis=0)
        else:
            s = jnp.sum(v, axis=0, keepdims=True)
            q = jnp.sum(v * v, axis=0, keepdims=True)
        sum_ref[...] += s[None]
        sq_ref[...] += q[None]

    if rows_per_slice % tile_rows != 0:
        # Ragged batch: only the final tile pays for the row mask.
        @pl.when(k < nk - 1)
        def _interior():
            accumulate(x)

        @pl.when(k == nk - 1)
        def _last():
            row = k * tile_rows + jax.lax.broadcasted_iota(jnp.int32, x.shape, 0)
            accumulate(jnp.where(row < rows_per_slice, x, 0.0))
    else:
        accumulate(x)


def _kln01_jnp(x2d, direction, minimize):
    """Plain-jnp fallback / reference (two-pass variance, exactly the module)."""
    s = x2d.astype(jnp.float32)
    mean = s.mean(0)
    var = ((s - mean[None, :]) ** 2).mean(0)
    if direction == "pq":
        kl = ((1.0 + mean**2) / (2.0 * var**2) + jnp.log(var) - 0.5).mean()
    else:
        kl = ((var + mean**2) / 2.0 - 0.5 * jnp.log(var) - 0.5).mean()
    if not minimize:
        kl = -kl
    return kl


def kln01_loss(samples, direction="pq", minimize=True, *,
               block_bytes=_DEFAULT_BLOCK_BYTES):
    """Pallas TPU implementation of KLN01Loss.forward. Returns a scalar f32."""
    assert direction in ("pq", "qp"), "direction?"
    assert samples.ndim >= 2
    n, c = samples.shape[0], samples.shape[1]
    # Mirrors the PyTorch assert: only trailing singleton dims beyond (N, C).
    assert samples.size == n * c, "?"
    x = samples.reshape(n, c)

    # Fast path: tiny inputs are cheaper in fused XLA than as a kernel launch.
    if n * c <= _FAST_PATH_ELEMS:
        return _kln01_jnp(x, direction, minimize)

    # Lane packing for narrow feature dims (C < 128): view the contiguous
    # buffer as (N/r, r*C) (free reshape) so every vreg lane and every DMA byte
    # carries useful data; the r copies of each feature are folded in the
    # wrapper.
    r = 1
    if c < 128:
        for cand in range(min(128 // c, n), 1, -1):
            if n % cand == 0:
                r = cand
                break
    n_eff = n // r
    cp = c * r
    x = x.reshape(n_eff, cp)
    itemsize = x.dtype.itemsize

    # Feature tiling: one contiguous block when it fits, else 128-aligned tiles
    # so VMEM stays bounded for wide flattened inputs (the AGE use case).
    tc = cp if cp <= _MAX_TC else _MAX_TC
    c_blocks = pl.cdiv(cp, tc)

    # Batch tile rows from a VMEM byte budget (amortizes the ~0.35us/step cost;
    # double-buffered input stays within every generation's scoped VMEM).
    tn = max(8, (block_bytes // (tc * itemsize)) // 64 * 64)
    if tn >= n_eff:
        tn = n_eff
        n_tiles_total = 1
    else:
        n_tiles_total = pl.cdiv(n_eff, tn)

    # Split the batch into two contiguous halves when it divides evenly so a
    # 2-TensorCore chip (v7x) streams half the HBM traffic per core; on 1-TC
    # chips this is step-count neutral (same tiles, two accumulator blocks).
    n_par = 2 if (n_eff % tn == 0 and n_tiles_total % 2 == 0
                  and n_tiles_total >= 2) else 1
    n_tiles = n_tiles_total // n_par
    rows_per_slice = n_eff // n_par

    # 8 sublane strips in the accumulator unless the (single) tile has a row
    # count that is not a multiple of 8.
    acc_rows = 8 if tn % 8 == 0 else 1

    kernel = functools.partial(_moments_kernel, rows_per_slice=rows_per_slice,
                               tile_rows=tn, acc_rows=acc_rows)

    moments = jax.ShapeDtypeStruct((n_par, acc_rows, cp), jnp.float32)
    out_spec = pl.BlockSpec((1, acc_rows, tc), lambda p, cb, k: (p, 0, cb))

    sums, sqs = pl.pallas_call(
        kernel,
        out_shape=(moments, moments),
        grid_spec=pltpu.PrefetchScalarGridSpec(
            num_scalar_prefetch=0,
            grid=(n_par, c_blocks, n_tiles),
            in_specs=[pl.BlockSpec((tn, tc),
                                   lambda p, cb, k: (p * n_tiles + k, cb))],
            out_specs=(out_spec, out_spec),
        ),
        compiler_params=pltpu.CompilerParams(
            dimension_semantics=("parallel", "parallel", "arbitrary"),
            vmem_limit_bytes=32 * 1024 * 1024),
        cost_estimate=pl.CostEstimate(
            flops=3 * n_eff * cp,
            transcendentals=0,
            bytes_accessed=n_eff * cp * itemsize + 2 * n_par * acc_rows * cp * 4),
    )(x)

    # O(C) finalize in the wrapper (free): fold partial moments, compute KL.
    tot_sum = jnp.sum(sums, axis=(0, 1))   # (cp,)
    tot_sq = jnp.sum(sqs, axis=(0, 1))
    if r > 1:
        tot_sum = tot_sum.reshape(r, c).sum(axis=0)
        tot_sq = tot_sq.reshape(r, c).sum(axis=0)

    inv_n = jnp.float32(1.0 / n)
    mean = tot_sum * inv_n
    # Single-pass biased variance (same algebra as utils.var). NOTE: can lose
    # precision when |mean| >> std; fine for roughly-standardized latents.
    var = tot_sq * inv_n - mean * mean
    if direction == "pq":
        # var**2 in the denominator reproduces the PyTorch source verbatim.
        terms = (1.0 + mean * mean) / (2.0 * var * var) + jnp.log(var) - 0.5
    else:
        terms = (var + mean * mean) * 0.5 - 0.5 * jnp.log(var) - 0.5
    kl = jnp.mean(terms)
    if not minimize:
        kl = -kl
    return kl


if __name__ == "__main__":
    key = jax.random.PRNGKey(0)
    k0, k1, k2, k3, k4 = jax.random.split(key, 5)

    def mk(k, shape):
        return jax.random.normal(k, shape, dtype=jnp.float32) * 1.3 + 0.2

    # Small, fast cases chosen to exercise every kernel path: jnp fast path,
    # single-tile, ragged last tile, two parallel batch slices, lane packing
    # for narrow C, and generic feature tiling (c_blocks = 2).
    cases = [
        ("fast-path",    mk(k0, (16, 32, 1, 1)), _DEFAULT_BLOCK_BYTES),
        ("single-tile",  mk(k1, (1000, 256)),    _DEFAULT_BLOCK_BYTES),
        ("ragged-tiles", mk(k1, (1000, 256)),    256 * 4 * 128),
        ("two-slices",   mk(k2, (1024, 256)),    256 * 4 * 128),
        ("lane-packed",  mk(k3, (4096, 64)),     128 * 4 * 256),
        ("wide-c-tiled", mk(k4, (128, 4096)),    _DEFAULT_BLOCK_BYTES),
    ]

    ok = True
    for name, samples, bb in cases:
        x2d = samples.reshape(samples.shape[0], -1)
        for direction in ("pq", "qp"):
            for minimize in (True, False):
                got = jax.block_until_ready(
                    kln01_loss(samples, direction, minimize, block_bytes=bb))
                want = jax.block_until_ready(
                    _kln01_jnp(x2d, direction, minimize))
                # Single-pass vs two-pass variance: tiny f32 drift allowed.
                if not jnp.allclose(got, want, rtol=5e-4, atol=1e-5):
                    ok = False
                    print(f"MISMATCH case={name} dir={direction} "
                          f"min={minimize}: got={got} want={want}")

    if ok:
        print("KERNEL_OK")
    else:
        print("MISMATCH")
</pallas_src>

<mosaic_0001>
module attributes {stable_mosaic.version = 11 : i64} {
  func.func @_moments_kernel(%arg0: i32, %arg1: i32, %arg2: i32, %arg3: memref<1000x256xf32, #tpu.memory_space<vmem>>, %arg4: memref<1x8x256xf32, #tpu.memory_space<vmem>>, %arg5: memref<1x8x256xf32, #tpu.memory_space<vmem>>) attributes {dimension_semantics = [#tpu.dimension_semantics<parallel>, #tpu.dimension_semantics<parallel>, #tpu.dimension_semantics<arbitrary>], iteration_bounds = array<i64: 1, 1, 1>, scalar_prefetch = 0 : i64, scratch_operands = 0 : i64, tpu.core_type = #tpu.core_type<tc>, window_params = [{transform_indices = @transform_0, window_bounds = array<i64: 1000, 256>}, {transform_indices = @transform_1, window_bounds = array<i64: 1, 8, 256>}, {transform_indices = @transform_2, window_bounds = array<i64: 1, 8, 256>}]} {
    %c0_i32 = arith.constant 0 : i32
    %0 = arith.cmpi eq, %arg2, %c0_i32 : i32
    %1 = arith.extui %0 : i1 to i32
    %c0_i32_0 = arith.constant 0 : i32
    %2 = arith.cmpi ne, %1, %c0_i32_0 : i32
    scf.if %2 {
      %cst_15 = arith.constant 0.000000e+00 : f32
      %16 = vector.broadcast %cst_15 : f32 to vector<1x8x256xf32>
      %c0_16 = arith.constant 0 : index
      %c0_17 = arith.constant 0 : index
      %c0_18 = arith.constant 0 : index
      %17 = vector.load %arg4[%c0_16, %c0_17, %c0_18] : memref<1x8x256xf32, #tpu.memory_space<vmem>>, vector<1x8x256xf32>
      tpu.vector_store %arg4[%c0_16, %c0_17, %c0_18], %16 {strides = array<i32>} : memref<1x8x256xf32, #tpu.memory_space<vmem>>, vector<1x8x256xf32>,
      %cst_19 = arith.constant 0.000000e+00 : f32
      %18 = vector.broadcast %cst_19 : f32 to vector<1x8x256xf32>
      %c0_20 = arith.constant 0 : index
      %c0_21 = arith.constant 0 : index
      %c0_22 = arith.constant 0 : index
      %19 = vector.load %arg5[%c0_20, %c0_21, %c0_22] : memref<1x8x256xf32, #tpu.memory_space<vmem>>, vector<1x8x256xf32>
      tpu.vector_store %arg5[%c0_20, %c0_21, %c0_22], %18 {strides = array<i32>} : memref<1x8x256xf32, #tpu.memory_space<vmem>>, vector<1x8x256xf32>,
    } else {
    }
    %c0 = arith.constant 0 : index
    %c0_1 = arith.constant 0 : index
    %3 = vector.load %arg3[%c0, %c0_1] : memref<1000x256xf32, #tpu.memory_space<vmem>>, vector<1000x256xf32>
    %4 = vector.shape_cast %3 : vector<1000x256xf32> to vector<125x8x256xf32>
    %cst = arith.constant dense<0.000000e+00> : vector<8x256xf32>
    %5 = vector.multi_reduction <add>, %4, %cst [0] : vector<125x8x256xf32> to vector<8x256xf32>
    %6 = arith.mulf %4, %4 : vector<125x8x256xf32>
    %cst_2 = arith.constant dense<0.000000e+00> : vector<8x256xf32>
    %7 = vector.multi_reduction <add>, %6, %cst_2 [0] : vector<125x8x256xf32> to vector<8x256xf32>
    %c0_3 = arith.constant 0 : index
    %c0_4 = arith.constant 0 : index
    %c0_5 = arith.constant 0 : index
    %8 = vector.load %arg4[%c0_3, %c0_4, %c0_5] : memref<1x8x256xf32, #tpu.memory_space<vmem>>, vector<1x8x256xf32>
    %9 = vector.shape_cast %5 : vector<8x256xf32> to vector<1x8x256xf32>
    %10 = arith.addf %8, %9 : vector<1x8x256xf32>
    %c0_6 = arith.constant 0 : index
    %c0_7 = arith.constant 0 : index
    %c0_8 = arith.constant 0 : index
    %11 = vector.load %arg4[%c0_6, %c0_7, %c0_8] : memref<1x8x256xf32, #tpu.memory_space<vmem>>, vector<1x8x256xf32>
    tpu.vector_store %arg4[%c0_6, %c0_7, %c0_8], %10 {strides = array<i32>} : memref<1x8x256xf32, #tpu.memory_space<vmem>>, vector<1x8x256xf32>,
    %c0_9 = arith.constant 0 : index
    %c0_10 = arith.constant 0 : index
    %c0_11 = arith.constant 0 : index
    %12 = vector.load %arg5[%c0_9, %c0_10, %c0_11] : memref<1x8x256xf32, #tpu.memory_space<vmem>>, vector<1x8x256xf32>
    %13 = vector.shape_cast %7 : vector<8x256xf32> to vector<1x8x256xf32>
    %14 = arith.addf %12, %13 : vector<1x8x256xf32>
    %c0_12 = arith.constant 0 : index
    %c0_13 = arith.constant 0 : index
    %c0_14 = arith.constant 0 : index
    %15 = vector.load %arg5[%c0_12, %c0_13, %c0_14] : memref<1x8x256xf32, #tpu.memory_space<vmem>>, vector<1x8x256xf32>
    tpu.vector_store %arg5[%c0_12, %c0_13, %c0_14], %14 {strides = array<i32>} : memref<1x8x256xf32, #tpu.memory_space<vmem>>, vector<1x8x256xf32>,
    return
  }
  func.func @transform_0(%arg0: i32, %arg1: i32, %arg2: i32) -> (i32, i32) {
    %c1_i32 = arith.constant 1 : i32
    %0 = arith.muli %arg0, %c1_i32 : i32
    %1 = arith.addi %0, %arg2 : i32
    %c0_i32 = arith.constant 0 : i32
    return %1, %arg1 : i32, i32
  }
  func.func @transform_1(%arg0: i32, %arg1: i32, %arg2: i32) -> (i32, i32, i32) {
    %c0_i32 = arith.constant 0 : i32
    %c0_i32_0 = arith.constant 0 : i32
    return %arg0, %c0_i32, %arg1 : i32, i32, i32
  }
  func.func @transform_2(%arg0: i32, %arg1: i32, %arg2: i32) -> (i32, i32, i32) {
    %c0_i32 = arith.constant 0 : i32
    %c0_i32_0 = arith.constant 0 : i32
    return %arg0, %c0_i32, %arg1 : i32, i32, i32
  }
}

</mosaic_0001>

<llo_original>
// kernel: tpu_custom_call.1
$region0: #{tpu_custom_call.1}
  #allocation0 [shape = 'u32[]', space=smem, size = 0x4, offset = 0x4, fixed_abs, tag = 'smem constant byte address 0x4 - core index']
  #allocation1 [shape = 'u32[144,128]{1,0:T(1,128)}', space=vmem, size = 0x12000, scoped, tag = 'internal scratch']
  %s0 = inlined_call_operand.hbm [shape: f32[1000,256], index: 0, kind: input, shape index: {}]
  %s1 = inlined_call_operand.hbm [shape: f32[1,8,256], index: 1, kind: output, shape index: {0}]
  %s2 = inlined_call_operand.hbm [shape: f32[1,8,256], index: 2, kind: output, shape index: {1}]
  %3 = xla_tuple %s1, %s2
  %s4 = sld [smem:[#allocation0]]
  $region30: #{tpu_custom_call.1} parent=0
    _
  %s6 = ssub.s32 1, %s4
  %s7 = scalar_select 0, %s6, %s4
  $region1: #{tpu_custom_call.1} parent=0
    #allocation2 [shape = 'u8[1024000]{0}', space=vmem, size = 0xfa000, scoped, tag = 'input window, operand 0, single buffered']
    #allocation3 [shape = 's32[1]{0}', space=sflag, size = 0x4, scoped, tag = 'scoped memory for tpu_custom_call.1']
    #allocation4 [shape = 's32[1]{0}', space=sflag, size = 0x4, scoped, tag = 'scoped memory for tpu_custom_call.1']
    #allocation5 [shape = 'u8[8192]{0}', space=vmem, size = 0x2000, scoped, tag = 'output window, operand 0, single buffered']
    #allocation6 [shape = 'u8[8192]{0}', space=vmem, size = 0x2000, scoped, tag = 'output window, operand 1, single buffered']
    #allocation7 [shape = 's32[1]{0}', space=sflag, size = 0x4, scoped, tag = 'scoped memory for tpu_custom_call.1']
    %8 = vsyncpa [#allocation3], 0
    %9 = vsyncpa [#allocation4], 0
    %10 = vsyncpa [#allocation7], 0
    // Predicated region
    $region2: #{tpu_custom_call.1} parent=1 // pred_check
      _
    $region3: #{tpu_custom_call.1} parent=1 // pred_check_branch
      %12 = sbr.rel (0) target = $region5
    $region4: #{tpu_custom_call.1} parent=1 // pred_region
      %s13 = sadd.s32 0, 0
      %s14 = smul.u32 125, %s13
      %s16 = ssub.s32 32000, 32000
      %17 = vsyncadd [#allocation3], %s16
      %s18 = smul.addr %s14, 2
      %s19 = smul.addr %s18, 128
      %s20 = scalar_lea.hbm %s0, %s19
      %s21 = sshll.u32 [#allocation2], 4
      %s22 = int_to_ptr.vmem [resolvable:$true] %s21
      %27 = dma.hbm_to_vmem [thread:$0]  %s20, 32000, %s22, [#allocation3], 256, 256, 16
    $region5: #{tpu_custom_call.1} parent=1 // pred_fallthru
      _
    // Predicated region
    $region6: #{tpu_custom_call.1} parent=1 // pred_check
      _
    $region7: #{tpu_custom_call.1} parent=1 // pred_check_branch
      %29 = sbr.rel (0) target = $region9
    $region8: #{tpu_custom_call.1} parent=1 // pred_region
      %30 = dma.done [#allocation3], 32000
    $region9: #{tpu_custom_call.1} parent=1 // pred_fallthru
      _
    %s31 = sadd.s32 0, 0
    %s32 = smul.u32 125, %s31
    %p33 = scmp.eq.s32.totalorder 0, 0
    // Predicated region
    $region10: #{tpu_custom_call.1} parent=1 // pred_check
      %p34 = pneg %p33
    $region11: #{tpu_custom_call.1} parent=1 // pred_check_branch
      %36 = sbr.rel (%p34) target = $region13
    $region12: #{tpu_custom_call.1} parent=1 // pred_region
      %37 = vst [vmem:[#allocation5] sm:$0xff] 0.0
      %38 = vst [vmem:[#allocation5 + $0x8] sm:$0xff] 0.0
      %39 = vst [vmem:[#allocation6] sm:$0xff] 0.0
      %40 = vst [vmem:[#allocation6 + $0x8] sm:$0xff] 0.0
    $region13: #{tpu_custom_call.1} parent=1 // pred_fallthru
      _
    %v41 = vld [vmem:[#allocation2] sm:$0xff]
    %v42 = vld [vmem:[#allocation2 + $0x8] sm:$0xff]
    %v43 = vld [vmem:[#allocation2 + $0x10] sm:$0xff]
    %v44 = vld [vmem:[#allocation2 + $0x18] sm:$0xff]
    %v45 = vld [vmem:[#allocation2 + $0x20] sm:$0xff]
    %v46 = vld [vmem:[#allocation2 + $0x28] sm:$0xff]
    %v47 = vld [vmem:[#allocation2 + $0x30] sm:$0xff]
    %v48 = vld [vmem:[#allocation2 + $0x38] sm:$0xff]
    %v49 = vld [vmem:[#allocation2 + $0x40] sm:$0xff]
    %v50 = vld [vmem:[#allocation2 + $0x48] sm:$0xff]
    %v51 = vld [vmem:[#allocation2 + $0x50] sm:$0xff]
    %v52 = vld [vmem:[#allocation2 + $0x58] sm:$0xff]
    %v53 = vld [vmem:[#allocation2 + $0x60] sm:$0xff]
    %v54 = vld [vmem:[#allocation2 + $0x68] sm:$0xff]
    %v55 = vld [vmem:[#allocation2 + $0x70] sm:$0xff]
    %v56 = vld [vmem:[#allocation2 + $0x78] sm:$0xff]
    %v57 = vld [vmem:[#allocation2 + $0x80] sm:$0xff]
    %v58 = vld [vmem:[#allocation2 + $0x88] sm:$0xff]
    %v59 = vld [vmem:[#allocation2 + $0x90] sm:$0xff]
    %v60 = vld [vmem:[#allocation2 + $0x98] sm:$0xff]
    %v61 = vld [vmem:[#allocation2 + $0xa0] sm:$0xff]
    %v62 = vld [vmem:[#allocation2 + $0xa8] sm:$0xff]
    %v63 = vld [vmem:[#allocation2 + $0xb0] sm:$0xff]
    %v64 = vld [vmem:[#allocation2 + $0xb8] sm:$0xff]
    %v65 = vld [vmem:[#allocation2 + $0xc0] sm:$0xff]
    %v66 = vld [vmem:[#allocation2 + $0xc8] sm:$0xff]
    %v67 = vld [vmem:[#allocation2 + $0xd0] sm:$0xff]
    %v68 = vld [vmem:[#allocation2 + $0xd8] sm:$0xff]
    %v69 = vld [vmem:[#allocation2 + $0xe0] sm:$0xff]
    %v70 = vld [vmem:[#allocation2 + $0xe8] sm:$0xff]
    %v71 = vld [vmem:[#allocation2 + $0xf0] sm:$0xff]
    %v72 = vld [vmem:[#allocation2 + $0xf8] sm:$0xff]
    %v73 = vld [vmem:[#allocation2 + $0x100] sm:$0xff]
    %v74 = vld [vmem:[#allocation2 + $0x108] sm:$0xff]
    %v75 = vld [vmem:[#allocation2 + $0x110] sm:$0xff]
    %v76 = vld [vmem:[#allocation2 + $0x118] sm:$0xff]
    %v77 = vld [vmem:[#allocation2 + $0x120] sm:$0xff]
    %v78 = vld [vmem:[#allocation2 + $0x128] sm:$0xff]
    %v79 = vld [vmem:[#allocation2 + $0x130] sm:$0xff]
    %v80 = vld [vmem:[#allocation2 + $0x138] sm:$0xff]
    %v81 = vld [vmem:[#allocation2 + $0x140] sm:$0xff]
    %v82 = vld [vmem:[#allocation2 + $0x148] sm:$0xff]
    %v83 = vld [vmem:[#allocation2 + $0x150] sm:$0xff]
    %v84 = vld [vmem:[#allocation2 + $0x158] sm:$0xff]
    %v85 = vld [vmem:[#allocation2 + $0x160] sm:$0xff]
    %v86 = vld [vmem:[#allocation2 + $0x168] sm:$0xff]
    %v87 = vld [vmem:[#allocation2 + $0x170] sm:$0xff]
    %v88 = vld [vmem:[#allocation2 + $0x178] sm:$0xff]
    %v89 = vld [vmem:[#allocation2 + $0x180] sm:$0xff]
    %v90 = vld [vmem:[#allocation2 + $0x188] sm:$0xff]
    %v91 = vld [vmem:[#allocation2 + $0x190] sm:$0xff]
    %v92 = vld [vmem:[#allocation2 + $0x198] sm:$0xff]
    %v93 = vld [vmem:[#allocation2 + $0x1a0] sm:$0xff]
    %v94 = vld [vmem:[#allocation2 + $0x1a8] sm:$0xff]
    %v95 = vld [vmem:[#allocation2 + $0x1b0] sm:$0xff]
    %v96 = vld [vmem:[#allocation2 + $0x1b8] sm:$0xff]
    %v97 = vld [vmem:[#allocation2 + $0x1c0] sm:$0xff]
    %v98 = vld [vmem:[#allocation2 + $0x1c8] sm:$0xff]
    %v99 = vld [vmem:[#allocation2 + $0x1d0] sm:$0xff]
    %v100 = vld [vmem:[#allocation2 + $0x1d8] sm:$0xff]
    %v101 = vld [vmem:[#allocation2 + $0x1e0] sm:$0xff]
    %v102 = vld [vmem:[#allocation2 + $0x1e8] sm:$0xff]
    %v103 = vld [vmem:[#allocation2 + $0x1f0] sm:$0xff]
    %v104 = vld [vmem:[#allocation2 + $0x1f8] sm:$0xff]
    %v105 = vld [vmem:[#allocation2 + $0x200] sm:$0xff]
    %v106 = vld [vmem:[#allocation2 + $0x208] sm:$0xff]
    %v107 = vld [vmem:[#allocation2 + $0x210] sm:$0xff]
    %v108 = vld [vmem:[#allocation2 + $0x218] sm:$0xff]
    %v109 = vld [vmem:[#allocation2 + $0x220] sm:$0xff]
    %v110 = vld [vmem:[#allocation2 + $0x228] sm:$0xff]
    %v111 = vld [vmem:[#allocation2 + $0x230] sm:$0xff]
    %v112 = vld [vmem:[#allocation2 + $0x238] sm:$0xff]
    %v113 = vld [vmem:[#allocation2 + $0x240] sm:$0xff]
    %v114 = vld [vmem:[#allocation2 + $0x248] sm:$0xff]
    %v115 = vld [vmem:[#allocation2 + $0x250] sm:$0xff]
    %v116 = vld [vmem:[#allocation2 + $0x258] sm:$0xff]
    %v117 = vld [vmem:[#allocation2 + $0x260] sm:$0xff]
    %v118 = vld [vmem:[#allocation2 + $0x268] sm:$0xff]
    %v119 = vld [vmem:[#allocation2 + $0x270] sm:$0xff]
    %v120 = vld [vmem:[#allocation2 + $0x278] sm:$0xff]
    %v121 = vld [vmem:[#allocation2 + $0x280] sm:$0xff]
    %v122 = vld [vmem:[#allocation2 + $0x288] sm:$0xff]
    %v123 = vld [vmem:[#allocation2 + $0x290] sm:$0xff]
    %v124 = vld [vmem:[#allocation2 + $0x298] sm:$0xff]
    %v125 = vld [vmem:[#allocation2 + $0x2a0] sm:$0xff]
    %v126 = vld [vmem:[#allocation2 + $0x2a8] sm:$0xff]
    %v127 = vld [vmem:[#allocation2 + $0x2b0] sm:$0xff]
    %v128 = vld [vmem:[#allocation2 + $0x2b8] sm:$0xff]
    %v129 = vld [vmem:[#allocation2 + $0x2c0] sm:$0xff]
    %v130 = vld [vmem:[#allocation2 + $0x2c8] sm:$0xff]
    %v131 = vld [vmem:[#allocation2 + $0x2d0] sm:$0xff]
    %v132 = vld [vmem:[#allocation2 + $0x2d8] sm:$0xff]
    %v133 = vld [vmem:[#allocation2 + $0x2e0] sm:$0xff]
    %v134 = vld [vmem:[#allocation2 + $0x2e8] sm:$0xff]
    %v135 = vld [vmem:[#allocation2 + $0x2f0] sm:$0xff]
    %v136 = vld [vmem:[#allocation2 + $0x2f8] sm:$0xff]
    %v137 = vld [vmem:[#allocation2 + $0x300] sm:$0xff]
    %v138 = vld [vmem:[#allocation2 + $0x308] sm:$0xff]
    %v139 = vld [vmem:[#allocation2 + $0x310] sm:$0xff]
    %v140 = vld [vmem:[#allocation2 + $0x318] sm:$0xff]
    %v141 = vld [vmem:[#allocation2 + $0x320] sm:$0xff]
    %v142 = vld [vmem:[#allocation2 + $0x328] sm:$0xff]
    %v143 = vld [vmem:[#allocation2 + $0x330] sm:$0xff]
    %v144 = vld [vmem:[#allocation2 + $0x338] sm:$0xff]
    %v145 = vld [vmem:[#allocation2 + $0x340] sm:$0xff]
    %v146 = vld [vmem:[#allocation2 + $0x348] sm:$0xff]
    %v147 = vld [vmem:[#allocation2 + $0x350] sm:$0xff]
    %v148 = vld [vmem:[#allocation2 + $0x358] sm:$0xff]
    %v149 = vld [vmem:[#allocation2 + $0x360] sm:$0xff]
    %v150 = vld [vmem:[#allocation2 + $0x368] sm:$0xff]
    %v151 = vld [vmem:[#allocation2 + $0x370] sm:$0xff]
    %v152 = vld [vmem:[#allocation2 + $0x378] sm:$0xff]
    %v153 = vld [vmem:[#allocation2 + $0x380] sm:$0xff]
    %v154 = vld [vmem:[#allocation2 + $0x388] sm:$0xff]
    %v155 = vld [vmem:[#allocation2 + $0x390] sm:$0xff]
    %v156 = vld [vmem:[#allocation2 + $0x398] sm:$0xff]
    %v157 = vld [vmem:[#allocation2 + $0x3a0] sm:$0xff]
    %v158 = vld [vmem:[#allocation2 + $0x3a8] sm:$0xff]
    %v159 = vld [vmem:[#allocation2 + $0x3b0] sm:$0xff]
    %v160 = vld [vmem:[#allocation2 + $0x3b8] sm:$0xff]
    %v161 = vld [vmem:[#allocation2 + $0x3c0] sm:$0xff]
    %v162 = vld [vmem:[#allocation2 + $0x3c8] sm:$0xff]
    %v163 = vld [vmem:[#allocation2 + $0x3d0] sm:$0xff]
    %v164 = vld [vmem:[#allocation2 + $0x3d8] sm:$0xff]
    %v165 = vld [vmem:[#allocation2 + $0x3e0] sm:$0xff]
    %v166 = vld [vmem:[#allocation2 + $0x3e8] sm:$0xff]
    %v167 = vld [vmem:[#allocation2 + $0x3f0] sm:$0xff]
    %v168 = vld [vmem:[#allocation2 + $0x3f8] sm:$0xff]
    %v169 = vld [vmem:[#allocation2 + $0x400] sm:$0xff]
    %v170 = vld [vmem:[#allocation2 + $0x408] sm:$0xff]
    %v171 = vld [vmem:[#allocation2 + $0x410] sm:$0xff]
    %v172 = vld [vmem:[#allocation2 + $0x418] sm:$0xff]
    %v173 = vld [vmem:[#allocation2 + $0x420] sm:$0xff]
    %v174 = vld [vmem:[#allocation2 + $0x428] sm:$0xff]
    %v175 = vld [vmem:[#allocation2 + $0x430] sm:$0xff]
    %v176 = vld [vmem:[#allocation2 + $0x438] sm:$0xff]
    %v177 = vld [vmem:[#allocation2 + $0x440] sm:$0xff]
    %v178 = vld [vmem:[#allocation2 + $0x448] sm:$0xff]
    %v179 = vld [vmem:[#allocation2 + $0x450] sm:$0xff]
    %v180 = vld [vmem:[#allocation2 + $0x458] sm:$0xff]
    %v181 = vld [vmem:[#allocation2 + $0x460] sm:$0xff]
    %v182 = vld [vmem:[#allocation2 + $0x468] sm:$0xff]
    %v183 = vld [vmem:[#allocation2 + $0x470] sm:$0xff]
    %v184 = vld [vmem:[#allocation2 + $0x478] sm:$0xff]
    %v185 = vld [vmem:[#allocation2 + $0x480] sm:$0xff]
    %v186 = vld [vmem:[#allocation2 + $0x488] sm:$0xff]
    %v187 = vld [vmem:[#allocation2 + $0x490] sm:$0xff]
    %v188 = vld [vmem:[#allocation2 + $0x498] sm:$0xff]
    %v189 = vld [vmem:[#allocation2 + $0x4a0] sm:$0xff]
    %v190 = vld [vmem:[#allocation2 + $0x4a8] sm:$0xff]
    %v191 = vld [vmem:[#allocation2 + $0x4b0] sm:$0xff]
    %v192 = vld [vmem:[#allocation2 + $0x4b8] sm:$0xff]
    %v193 = vld [vmem:[#allocation2 + $0x4c0] sm:$0xff]
    %v194 = vld [vmem:[#allocation2 + $0x4c8] sm:$0xff]
    %v195 = vld [vmem:[#allocation2 + $0x4d0] sm:$0xff]
    %v196 = vld [vmem:[#allocation2 + $0x4d8] sm:$0xff]
    %v197 = vld [vmem:[#allocation2 + $0x4e0] sm:$0xff]
    %v198 = vld [vmem:[#allocation2 + $0x4e8] sm:$0xff]
    %v199 = vld [vmem:[#allocation2 + $0x4f0] sm:$0xff]
    %v200 = vld [vmem:[#allocation2 + $0x4f8] sm:$0xff]
    %v201 = vld [vmem:[#allocation2 + $0x500] sm:$0xff]
    %v202 = vld [vmem:[#allocation2 + $0x508] sm:$0xff]
    %v203 = vld [vmem:[#allocation2 + $0x510] sm:$0xff]
    %v204 = vld [vmem:[#allocation2 + $0x518] sm:$0xff]
    %v205 = vld [vmem:[#allocation2 + $0x520] sm:$0xff]
    %v206 = vld [vmem:[#allocation2 + $0x528] sm:$0xff]
    %v207 = vld [vmem:[#allocation2 + $0x530] sm:$0xff]
    %v208 = vld [vmem:[#allocation2 + $0x538] sm:$0xff]
    %v209 = vld [vmem:[#allocation2 + $0x540] sm:$0xff]
    %v210 = vld [vmem:[#allocation2 + $0x548] sm:$0xff]
    %v211 = vld [vmem:[#allocation2 + $0x550] sm:$0xff]
    %v212 = vld [vmem:[#allocation2 + $0x558] sm:$0xff]
    %v213 = vld [vmem:[#allocation2 + $0x560] sm:$0xff]
    %v214 = vld [vmem:[#allocation2 + $0x568] sm:$0xff]
    %v215 = vld [vmem:[#allocation2 + $0x570] sm:$0xff]
    %v216 = vld [vmem:[#allocation2 + $0x578] sm:$0xff]
    %v217 = vld [vmem:[#allocation2 + $0x580] sm:$0xff]
    %v218 = vld [vmem:[#allocation2 + $0x588] sm:$0xff]
    %v219 = vld [vmem:[#allocation2 + $0x590] sm:$0xff]
    %v220 = vld [vmem:[#allocation2 + $0x598] sm:$0xff]
    %v221 = vld [vmem:[#allocation2 + $0x5a0] sm:$0xff]
    %v222 = vld [vmem:[#allocation2 + $0x5a8] sm:$0xff]
    %v223 = vld [vmem:[#allocation2 + $0x5b0] sm:$0xff]
    %v224 = vld [vmem:[#allocation2 + $0x5b8] sm:$0xff]
    %v225 = vld [vmem:[#allocation2 + $0x5c0] sm:$0xff]
    %v226 = vld [vmem:[#allocation2 + $0x5c8] sm:$0xff]
    %v227 = vld [vmem:[#allocation2 + $0x5d0] sm:$0xff]
    %v228 = vld [vmem:[#allocation2 + $0x5d8] sm:$0xff]
    %v229 = vld [vmem:[#allocation2 + $0x5e0] sm:$0xff]
    %v230 = vld [vmem:[#allocation2 + $0x5e8] sm:$0xff]
    %v231 = vld [vmem:[#allocation2 + $0x5f0] sm:$0xff]
    %v232 = vld [vmem:[#allocation2 + $0x5f8] sm:$0xff]
    %v233 = vld [vmem:[#allocation2 + $0x600] sm:$0xff]
    %v234 = vld [vmem:[#allocation2 + $0x608] sm:$0xff]
    %v235 = vld [vmem:[#allocation2 + $0x610] sm:$0xff]
    %v236 = vld [vmem:[#allocation2 + $0x618] sm:$0xff]
    %v237 = vld [vmem:[#allocation2 + $0x620] sm:$0xff]
    %v238 = vld [vmem:[#allocation2 + $0x628] sm:$0xff]
    %v239 = vld [vmem:[#allocation2 + $0x630] sm:$0xff]
    %v240 = vld [vmem:[#allocation2 + $0x638] sm:$0xff]
    %v241 = vld [vmem:[#allocation2 + $0x640] sm:$0xff]
    %v242 = vld [vmem:[#allocation2 + $0x648] sm:$0xff]
    %v243 = vld [vmem:[#allocation2 + $0x650] sm:$0xff]
    %v244 = vld [vmem:[#allocation2 + $0x658] sm:$0xff]
    %v245 = vld [vmem:[#allocation2 + $0x660] sm:$0xff]
    %v246 = vld [vmem:[#allocation2 + $0x668] sm:$0xff]
    %v247 = vld [vmem:[#allocation2 + $0x670] sm:$0xff]
    %v248 = vld [vmem:[#allocation2 + $0x678] sm:$0xff]
    %v249 = vld [vmem:[#allocation2 + $0x680] sm:$0xff]
    %v250 = vld [vmem:[#allocation2 + $0x688] sm:$0xff]
    %v251 = vld [vmem:[#allocation2 + $0x690] sm:$0xff]
    %v252 = vld [vmem:[#allocation2 + $0x698] sm:$0xff]
    %v253 = vld [vmem:[#allocation2 + $0x6a0] sm:$0xff]
    %v254 = vld [vmem:[#allocation2 + $0x6a8] sm:$0xff]
    %v255 = vld [vmem:[#allocation2 + $0x6b0] sm:$0xff]
    %v256 = vld [vmem:[#allocation2 + $0x6b8] sm:$0xff]
    %v257 = vld [vmem:[#allocation2 + $0x6c0] sm:$0xff]
    %v258 = vld [vmem:[#allocation2 + $0x6c8] sm:$0xff]
    %v259 = vld [vmem:[#allocation2 + $0x6d0] sm:$0xff]
    %v260 = vld [vmem:[#allocation2 + $0x6d8] sm:$0xff]
    %v261 = vld [vmem:[#allocation2 + $0x6e0] sm:$0xff]
    %v262 = vld [vmem:[#allocation2 + $0x6e8] sm:$0xff]
    %v263 = vld [vmem:[#allocation2 + $0x6f0] sm:$0xff]
    %v264 = vld [vmem:[#allocation2 + $0x6f8] sm:$0xff]
    %v265 = vld [vmem:[#allocation2 + $0x700] sm:$0xff]
    %v266 = vld [vmem:[#allocation2 + $0x708] sm:$0xff]
    %v267 = vld [vmem:[#allocation2 + $0x710] sm:$0xff]
    %v268 = vld [vmem:[#allocation2 + $0x718] sm:$0xff]
    %v269 = vld [vmem:[#allocation2 + $0x720] sm:$0xff]
    %v270 = vld [vmem:[#allocation2 + $0x728] sm:$0xff]
    %v271 = vld [vmem:[#allocation2 + $0x730] sm:$0xff]
    %v272 = vld [vmem:[#allocation2 + $0x738] sm:$0xff]
    %v273 = vld [vmem:[#allocation2 + $0x740] sm:$0xff]
    %v274 = vld [vmem:[#allocation2 + $0x748] sm:$0xff]
    %v275 = vld [vmem:[#allocation2 + $0x750] sm:$0xff]
    %v276 = vld [vmem:[#allocation2 + $0x758] sm:$0xff]
    %v277 = vld [vmem:[#allocation2 + $0x760] sm:$0xff]
    %v278 = vld [vmem:[#allocation2 + $0x768] sm:$0xff]
    %v279 = vld [vmem:[#allocation2 + $0x770] sm:$0xff]
    %v280 = vld [vmem:[#allocation2 + $0x778] sm:$0xff]
    %v281 = vld [vmem:[#allocation2 + $0x780] sm:$0xff]
    %v282 = vld [vmem:[#allocation2 + $0x788] sm:$0xff]
    %v283 = vld [vmem:[#allocation2 + $0x790] sm:$0xff]
    %v284 = vld [vmem:[#allocation2 + $0x798] sm:$0xff]
    %v285 = vld [vmem:[#allocation2 + $0x7a0] sm:$0xff]
    %v286 = vld [vmem:[#allocation2 + $0x7a8] sm:$0xff]
    %v287 = vld [vmem:[#allocation2 + $0x7b0] sm:$0xff]
    %v288 = vld [vmem:[#allocation2 + $0x7b8] sm:$0xff]
    %v289 = vld [vmem:[#allocation2 + $0x7c0] sm:$0xff]
    %v290 = vld [vmem:[#allocation2 + $0x7c8] sm:$0xff]
    %v291 = vadd.f32 %v41, %v43
    %v292 = vadd.f32 %v291, %v45
    %v293 = vadd.f32 %v292, %v47
    %v294 = vadd.f32 %v293, %v49
    %v295 = vadd.f32 %v294, %v51
    %v296 = vadd.f32 %v295, %v53
    %v297 = vadd.f32 %v296, %v55
    %v298 = vadd.f32 %v297, %v57
    %v299 = vadd.f32 %v298, %v59
    %v300 = vadd.f32 %v299, %v61
    %v301 = vadd.f32 %v300, %v63
    %v302 = vadd.f32 %v301, %v65
    %v303 = vadd.f32 %v302, %v67
    %v304 = vadd.f32 %v303, %v69
    %v305 = vadd.f32 %v304, %v71
    %v306 = vadd.f32 %v305, %v73
    %v307 = vadd.f32 %v306, %v75
    %v308 = vadd.f32 %v307, %v77
    %v309 = vadd.f32 %v308, %v79
    %v310 = vadd.f32 %v309, %v81
    %v311 = vadd.f32 %v310, %v83
    %v312 = vadd.f32 %v311, %v85
    %v313 = vadd.f32 %v312, %v87
    %v314 = vadd.f32 %v313, %v89
    %v315 = vadd.f32 %v314, %v91
    %v316 = vadd.f32 %v315, %v93
    %v317 = vadd.f32 %v316, %v95
    %v318 = vadd.f32 %v317, %v97
    %v319 = vadd.f32 %v318, %v99
    %v320 = vadd.f32 %v319, %v101
    %v321 = vadd.f32 %v320, %v103
    %v322 = vadd.f32 %v321, %v105
    %v323 = vadd.f32 %v322, %v107
    %v324 = vadd.f32 %v323, %v109
    %v325 = vadd.f32 %v324, %v111
    %v326 = vadd.f32 %v325, %v113
    %v327 = vadd.f32 %v326, %v115
    %v328 = vadd.f32 %v327, %v117
    %v329 = vadd.f32 %v328, %v119
    %v330 = vadd.f32 %v329, %v121
    %v331 = vadd.f32 %v330, %v123
    %v332 = vadd.f32 %v331, %v125
    %v333 = vadd.f32 %v332, %v127
    %v334 = vadd.f32 %v333, %v129
    %v335 = vadd.f32 %v334, %v131
    %v336 = vadd.f32 %v335, %v133
    %v337 = vadd.f32 %v336, %v135
    %v338 = vadd.f32 %v337, %v137
    %v339 = vadd.f32 %v338, %v139
    %v340 = vadd.f32 %v339, %v141
    %v341 = vadd.f32 %v340, %v143
    %v342 = vadd.f32 %v341, %v145
    %v343 = vadd.f32 %v342, %v147
    %v344 = vadd.f32 %v343, %v149
    %v345 = vadd.f32 %v344, %v151
    %v346 = vadd.f32 %v345, %v153
    %v347 = vadd.f32 %v346, %v155
    %v348 = vadd.f32 %v347, %v157
    %v349 = vadd.f32 %v348, %v159
    %v350 = vadd.f32 %v349, %v161
    %v351 = vadd.f32 %v350, %v163
    %v352 = vadd.f32 %v351, %v165
    %v353 = vadd.f32 %v352, %v167
    %v354 = vadd.f32 %v353, %v169
    %v355 = vadd.f32 %v354, %v171
    %v356 = vadd.f32 %v355, %v173
    %v357 = vadd.f32 %v356, %v175
    %v358 = vadd.f32 %v357, %v177
    %v359 = vadd.f32 %v358, %v179
    %v360 = vadd.f32 %v359, %v181
    %v361 = vadd.f32 %v360, %v183
    %v362 = vadd.f32 %v361, %v185
    %v363 = vadd.f32 %v362, %v187
    %v364 = vadd.f32 %v363, %v189
    %v365 = vadd.f32 %v364, %v191
    %v366 = vadd.f32 %v365, %v193
    %v367 = vadd.f32 %v366, %v195
    %v368 = vadd.f32 %v367, %v197
    %v369 = vadd.f32 %v368, %v199
    %v370 = vadd.f32 %v369, %v201
    %v371 = vadd.f32 %v370, %v203
    %v372 = vadd.f32 %v371, %v205
    %v373 = vadd.f32 %v372, %v207
    %v374 = vadd.f32 %v373, %v209
    %v375 = vadd.f32 %v374, %v211
    %v376 = vadd.f32 %v375, %v213
    %v377 = vadd.f32 %v376, %v215
    %v378 = vadd.f32 %v377, %v217
    %v379 = vadd.f32 %v378, %v219
    %v380 = vadd.f32 %v379, %v221
    %v381 = vadd.f32 %v380, %v223
    %v382 = vadd.f32 %v381, %v225
    %v383 = vadd.f32 %v382, %v227
    %v384 = vadd.f32 %v383, %v229
    %v385 = vadd.f32 %v384, %v231
    %v386 = vadd.f32 %v385, %v233
    %v387 = vadd.f32 %v386, %v235
    %v388 = vadd.f32 %v387, %v237
    %v389 = vadd.f32 %v388, %v239
    %v390 = vadd.f32 %v389, %v241
    %v391 = vadd.f32 %v390, %v243
    %v392 = vadd.f32 %v391, %v245
    %v393 = vadd.f32 %v392, %v247
    %v394 = vadd.f32 %v393, %v249
    %v395 = vadd.f32 %v394, %v251
    %v396 = vadd.f32 %v395, %v253
    %v397 = vadd.f32 %v396, %v255
    %v398 = vadd.f32 %v397, %v257
    %v399 = vadd.f32 %v398, %v259
    %v400 = vadd.f32 %v399, %v261
    %v401 = vadd.f32 %v400, %v263
    %v402 = vadd.f32 %v401, %v265
    %v403 = vadd.f32 %v402, %v267
    %v404 = vadd.f32 %v403, %v269
    %v405 = vadd.f32 %v404, %v271
    %v406 = vadd.f32 %v405, %v273
    %v407 = vadd.f32 %v406, %v275
    %v408 = vadd.f32 %v407, %v277
    %v409 = vadd.f32 %v408, %v279
    %v410 = vadd.f32 %v409, %v281
    %v411 = vadd.f32 %v410, %v283
    %v412 = vadd.f32 %v411, %v285
    %v413 = vadd.f32 %v412, %v287
    %v414 = vadd.f32 %v413, %v289
    %v415 = vadd.f32 %v42, %v44
    %v416 = vadd.f32 %v415, %v46
    %v417 = vadd.f32 %v416, %v48
    %v418 = vadd.f32 %v417, %v50
    %v419 = vadd.f32 %v418, %v52
    %v420 = vadd.f32 %v419, %v54
    %v421 = vadd.f32 %v420, %v56
    %v422 = vadd.f32 %v421, %v58
    %v423 = vadd.f32 %v422, %v60
    %v424 = vadd.f32 %v423, %v62
    %v425 = vadd.f32 %v424, %v64
    %v426 = vadd.f32 %v425, %v66
    %v427 = vadd.f32 %v426, %v68
    %v428 = vadd.f32 %v427, %v70
    %v429 = vadd.f32 %v428, %v72
    %v430 = vadd.f32 %v429, %v74
    %v431 = vadd.f32 %v430, %v76
    %v432 = vadd.f32 %v431, %v78
    %v433 = vadd.f32 %v432, %v80
    %v434 = vadd.f32 %v433, %v82
    %v435 = vadd.f32 %v434, %v84
    %v436 = vadd.f32 %v435, %v86
    %v437 = vadd.f32 %v436, %v88
    %v438 = vadd.f32 %v437, %v90
    %v439 = vadd.f32 %v438, %v92
    %v440 = vadd.f32 %v439, %v94
    %v441 = vadd.f32 %v440, %v96
    %v442 = vadd.f32 %v441, %v98
    %v443 = vadd.f32 %v442, %v100
    %v444 = vadd.f32 %v443, %v102
    %v445 = vadd.f32 %v444, %v104
    %v446 = vadd.f32 %v445, %v106
    %v447 = vadd.f32 %v446, %v108
    %v448 = vadd.f32 %v447, %v110
    %v449 = vadd.f32 %v448, %v112
    %v450 = vadd.f32 %v449, %v114
    %v451 = vadd.f32 %v450, %v116
    %v452 = vadd.f32 %v451, %v118
    %v453 = vadd.f32 %v452, %v120
    %v454 = vadd.f32 %v453, %v122
    %v455 = vadd.f32 %v454, %v124
    %v456 = vadd.f32 %v455, %v126
    %v457 = vadd.f32 %v456, %v128
    %v458 = vadd.f32 %v457, %v130
    %v459 = vadd.f32 %v458, %v132
    %v460 = vadd.f32 %v459, %v134
    %v461 = vadd.f32 %v460, %v136
    %v462 = vadd.f32 %v461, %v138
    %v463 = vadd.f32 %v462, %v140
    %v464 = vadd.f32 %v463, %v142
    %v465 = vadd.f32 %v464, %v144
    %v466 = vadd.f32 %v465, %v146
    %v467 = vadd.f32 %v466, %v148
    %v468 = vadd.f32 %v467, %v150
    %v469 = vadd.f32 %v468, %v152
    %v470 = vadd.f32 %v469, %v154
    %v471 = vadd.f32 %v470, %v156
    %v472 = vadd.f32 %v471, %v158
    %v473 = vadd.f32 %v472, %v160
    %v474 = vadd.f32 %v473, %v162
    %v475 = vadd.f32 %v474, %v164
    %v476 = vadd.f32 %v475, %v166
    %v477 = vadd.f32 %v476, %v168
    %v478 = vadd.f32 %v477, %v170
    %v479 = vadd.f32 %v478, %v172
    %v480 = vadd.f32 %v479, %v174
    %v481 = vadd.f32 %v480, %v176
    %v482 = vadd.f32 %v481, %v178
    %v483 = vadd.f32 %v482, %v180
    %v484 = vadd.f32 %v483, %v182
    %v485 = vadd.f32 %v484, %v184
    %v486 = vadd.f32 %v485, %v186
    %v487 = vadd.f32 %v486, %v188
    %v488 = vadd.f32 %v487, %v190
    %v489 = vadd.f32 %v488, %v192
    %v490 = vadd.f32 %v489, %v194
    %v491 = vadd.f32 %v490, %v196
    %v492 = vadd.f32 %v491, %v198
    %v493 = vadd.f32 %v492, %v200
    %v494 = vadd.f32 %v493, %v202
    %v495 = vadd.f32 %v494, %v204
    %v496 = vadd.f32 %v495, %v206
    %v497 = vadd.f32 %v496, %v208
    %v498 = vadd.f32 %v497, %v210
    %v499 = vadd.f32 %v498, %v212
    %v500 = vadd.f32 %v499, %v214
    %v501 = vadd.f32 %v500, %v216
    %v502 = vadd.f32 %v501, %v218
    %v503 = vadd.f32 %v502, %v220
    %v504 = vadd.f32 %v503, %v222
    %v505 = vadd.f32 %v504, %v224
    %v506 = vadd.f32 %v505, %v226
    %v507 = vadd.f32 %v506, %v228
    %v508 = vadd.f32 %v507, %v230
    %v509 = vadd.f32 %v508, %v232
    %v510 = vadd.f32 %v509, %v234
    %v511 = vadd.f32 %v510, %v236
    %v512 = vadd.f32 %v511, %v238
    %v513 = vadd.f32 %v512, %v240
    %v514 = vadd.f32 %v513, %v242
    %v515 = vadd.f32 %v514, %v244
    %v516 = vadd.f32 %v515, %v246
    %v517 = vadd.f32 %v516, %v248
    %v518 = vadd.f32 %v517, %v250
    %v519 = vadd.f32 %v518, %v252
    %v520 = vadd.f32 %v519, %v254
    %v521 = vadd.f32 %v520, %v256
    %v522 = vadd.f32 %v521, %v258
    %v523 = vadd.f32 %v522, %v260
    %v524 = vadd.f32 %v523, %v262
    %v525 = vadd.f32 %v524, %v264
    %v526 = vadd.f32 %v525, %v266
    %v527 = vadd.f32 %v526, %v268
    %v528 = vadd.f32 %v527, %v270
    %v529 = vadd.f32 %v528, %v272
    %v530 = vadd.f32 %v529, %v274
    %v531 = vadd.f32 %v530, %v276
    %v532 = vadd.f32 %v531, %v278
    %v533 = vadd.f32 %v532, %v280
    %v534 = vadd.f32 %v533, %v282
    %v535 = vadd.f32 %v534, %v284
    %v536 = vadd.f32 %v535, %v286
    %v537 = vadd.f32 %v536, %v288
    %v538 = vadd.f32 %v537, %v290
    %v539 = vmul.f32 %v41, %v41
    %v540 = vmul.f32 %v42, %v42
    %v541 = vmul.f32 %v43, %v43
    %v542 = vmul.f32 %v44, %v44
    %v543 = vmul.f32 %v45, %v45
    %v544 = vmul.f32 %v46, %v46
    %v545 = vmul.f32 %v47, %v47
    %v546 = vmul.f32 %v48, %v48
    %v547 = vmul.f32 %v49, %v49
    %v548 = vmul.f32 %v50, %v50
    %v549 = vmul.f32 %v51, %v51
    %v550 = vmul.f32 %v52, %v52
    %v551 = vmul.f32 %v53, %v53
    %v552 = vmul.f32 %v54, %v54
    %v553 = vmul.f32 %v55, %v55
    %v554 = vmul.f32 %v56, %v56
    %v555 = vmul.f32 %v57, %v57
    %v556 = vmul.f32 %v58, %v58
    %v557 = vmul.f32 %v59, %v59
    %v558 = vmul.f32 %v60, %v60
    %v559 = vmul.f32 %v61, %v61
    %v560 = vmul.f32 %v62, %v62
    %v561 = vmul.f32 %v63, %v63
    %v562 = vmul.f32 %v64, %v64
    %v563 = vmul.f32 %v65, %v65
    %v564 = vmul.f32 %v66, %v66
    %v565 = vmul.f32 %v67, %v67
    %v566 = vmul.f32 %v68, %v68
    %v567 = vmul.f32 %v69, %v69
    %v568 = vmul.f32 %v70, %v70
    %v569 = vmul.f32 %v71, %v71
    %v570 = vmul.f32 %v72, %v72
    %v571 = vmul.f32 %v73, %v73
    %v572 = vmul.f32 %v74, %v74
    %v573 = vmul.f32 %v75, %v75
    %v574 = vmul.f32 %v76, %v76
    %v575 = vmul.f32 %v77, %v77
    %v576 = vmul.f32 %v78, %v78
    %v577 = vmul.f32 %v79, %v79
    %v578 = vmul.f32 %v80, %v80
    %v579 = vmul.f32 %v81, %v81
    %v580 = vmul.f32 %v82, %v82
    %v581 = vmul.f32 %v83, %v83
    %v582 = vmul.f32 %v84, %v84
    %v583 = vmul.f32 %v85, %v85
    %v584 = vmul.f32 %v86, %v86
    %v585 = vmul.f32 %v87, %v87
    %v586 = vmul.f32 %v88, %v88
    %v587 = vmul.f32 %v89, %v89
    %v588 = vmul.f32 %v90, %v90
    %v589 = vmul.f32 %v91, %v91
    %v590 = vmul.f32 %v92, %v92
    %v591 = vmul.f32 %v93, %v93
    %v592 = vmul.f32 %v94, %v94
    %v593 = vmul.f32 %v95, %v95
    %v594 = vmul.f32 %v96, %v96
    %v595 = vmul.f32 %v97, %v97
    %v596 = vmul.f32 %v98, %v98
    %v597 = vmul.f32 %v99, %v99
    %v598 = vmul.f32 %v100, %v100
    %v599 = vmul.f32 %v101, %v101
    %v600 = vmul.f32 %v102, %v102
    %v601 = vmul.f32 %v103, %v103
    %v602 = vmul.f32 %v104, %v104
    %v603 = vmul.f32 %v105, %v105
    %v604 = vmul.f32 %v106, %v106
    %v605 = vmul.f32 %v107, %v107
    %v606 = vmul.f32 %v108, %v108
    %v607 = vmul.f32 %v109, %v109
    %v608 = vmul.f32 %v110, %v110
    %v609 = vmul.f32 %v111, %v111
    %v610 = vmul.f32 %v112, %v112
    %v611 = vmul.f32 %v113, %v113
    %v612 = vmul.f32 %v114, %v114
    %v613 = vmul.f32 %v115, %v115
    %v614 = vmul.f32 %v116, %v116
    %v615 = vmul.f32 %v117, %v117
    %v616 = vmul.f32 %v118, %v118
    %v617 = vmul.f32 %v119, %v119
    %v618 = vmul.f32 %v120, %v120
    %v619 = vmul.f32 %v121, %v121
    %v620 = vmul.f32 %v122, %v122
    %v621 = vmul.f32 %v123, %v123
    %v622 = vmul.f32 %v124, %v124
    %v623 = vmul.f32 %v125, %v125
    %v624 = vmul.f32 %v126, %v126
    %v625 = vmul.f32 %v127, %v127
    %v626 = vmul.f32 %v128, %v128
    %v627 = vmul.f32 %v129, %v129
    %v628 = vmul.f32 %v130, %v130
    %v629 = vmul.f32 %v131, %v131
    %v630 = vmul.f32 %v132, %v132
    %v631 = vmul.f32 %v133, %v133
    %v632 = vmul.f32 %v134, %v134
    %v633 = vmul.f32 %v135, %v135
    %v634 = vmul.f32 %v136, %v136
    %v635 = vmul.f32 %v137, %v137
    %v636 = vmul.f32 %v138, %v138
    %v637 = vmul.f32 %v139, %v139
    %v638 = vmul.f32 %v140, %v140
    %v639 = vmul.f32 %v141, %v141
    %v640 = vmul.f32 %v142, %v142
    %v641 = vmul.f32 %v143, %v143
    %v642 = vmul.f32 %v144, %v144
    %v643 = vmul.f32 %v145, %v145
    %v644 = vmul.f32 %v146, %v146
    %v645 = vmul.f32 %v147, %v147
    %v646 = vmul.f32 %v148, %v148
    %v647 = vmul.f32 %v149, %v149
    %v648 = vmul.f32 %v150, %v150
    %v649 = vmul.f32 %v151, %v151
    %v650 = vmul.f32 %v152, %v152
    %v651 = vmul.f32 %v153, %v153
    %v652 = vmul.f32 %v154, %v154
    %v653 = vmul.f32 %v155, %v155
    %v654 = vmul.f32 %v156, %v156
    %v655 = vmul.f32 %v157, %v157
    %v656 = vmul.f32 %v158, %v158
    %v657 = vmul.f32 %v159, %v159
    %v658 = vmul.f32 %v160, %v160
    %v659 = vmul.f32 %v161, %v161
    %v660 = vmul.f32 %v162, %v162
    %v661 = vmul.f32 %v163, %v163
    %v662 = vmul.f32 %v164, %v164
    %v663 = vmul.f32 %v165, %v165
    %v664 = vmul.f32 %v166, %v166
    %v665 = vmul.f32 %v167, %v167
    %v666 = vmul.f32 %v168, %v168
    %v667 = vmul.f32 %v169, %v169
    %v668 = vmul.f32 %v170, %v170
    %v669 = vmul.f32 %v171, %v171
    %v670 = vmul.f32 %v172, %v172
    %v671 = vmul.f32 %v173, %v173
    %v672 = vmul.f32 %v174, %v174
    %v673 = vmul.f32 %v175, %v175
    %v674 = vmul.f32 %v176, %v176
    %v675 = vmul.f32 %v177, %v177
    %v676 = vmul.f32 %v178, %v178
    %v677 = vmul.f32 %v179, %v179
    %v678 = vmul.f32 %v180, %v180
    %v679 = vmul.f32 %v181, %v181
    %v680 = vmul.f32 %v182, %v182
    %v681 = vmul.f32 %v183, %v183
    %v682 = vmul.f32 %v184, %v184
    %v683 = vmul.f32 %v185, %v185
    %v684 = vmul.f32 %v186, %v186
    %v685 = vmul.f32 %v187, %v187
    %v686 = vmul.f32 %v188, %v188
    %v687 = vmul.f32 %v189, %v189
    %v688 = vmul.f32 %v190, %v190
    %v689 = vmul.f32 %v191, %v191
    %v690 = vmul.f32 %v192, %v192
    %v691 = vmul.f32 %v193, %v193
    %v692 = vmul.f32 %v194, %v194
    %v693 = vmul.f32 %v195, %v195
    %v694 = vmul.f32 %v196, %v196
    %v695 = vmul.f32 %v197, %v197
    %v696 = vmul.f32 %v198, %v198
    %v697 = vmul.f32 %v199, %v199
    %v698 = vmul.f32 %v200, %v200
    %v699 = vmul.f32 %v201, %v201
    %v700 = vmul.f32 %v202, %v202
    %v701 = vmul.f32 %v203, %v203
    %v702 = vmul.f32 %v204, %v204
    %v703 = vmul.f32 %v205, %v205
    %v704 = vmul.f32 %v206, %v206
    %v705 = vmul.f32 %v207, %v207
    %v706 = vmul.f32 %v208, %v208
    %v707 = vmul.f32 %v209, %v209
    %v708 = vmul.f32 %v210, %v210
    %v709 = vmul.f32 %v211, %v211
    %v710 = vmul.f32 %v212, %v212
    %v711 = vmul.f32 %v213, %v213
    %v712 = vmul.f32 %v214, %v214
    %v713 = vmul.f32 %v215, %v215
    %v714 = vmul.f32 %v216, %v216
    %v715 = vmul.f32 %v217, %v217
    %v716 = vmul.f32 %v218, %v218
    %v717 = vmul.f32 %v219, %v219
    %v718 = vmul.f32 %v220, %v220
    %v719 = vmul.f32 %v221, %v221
    %v720 = vmul.f32 %v222, %v222
    %v721 = vmul.f32 %v223, %v223
    %v722 = vmul.f32 %v224, %v224
    %v723 = vmul.f32 %v225, %v225
    %v724 = vmul.f32 %v226, %v226
    %v725 = vmul.f32 %v227, %v227
    %v726 = vmul.f32 %v228, %v228
    %v727 = vmul.f32 %v229, %v229
    %v728 = vmul.f32 %v230, %v230
    %v729 = vmul.f32 %v231, %v231
    %v730 = vmul.f32 %v232, %v232
    %v731 = vmul.f32 %v233, %v233
    %v732 = vmul.f32 %v234, %v234
    %v733 = vmul.f32 %v235, %v235
    %v734 = vmul.f32 %v236, %v236
    %v735 = vmul.f32 %v237, %v237
    %v736 = vmul.f32 %v238, %v238
    %v737 = vmul.f32 %v239, %v239
    %v738 = vmul.f32 %v240, %v240
    %v739 = vmul.f32 %v241, %v241
    %v740 = vmul.f32 %v242, %v242
    %v741 = vmul.f32 %v243, %v243
    %v742 = vmul.f32 %v244, %v244
    %v743 = vmul.f32 %v245, %v245
    %v744 = vmul.f32 %v246, %v246
    %v745 = vmul.f32 %v247, %v247
    %v746 = vmul.f32 %v248, %v248
    %v747 = vmul.f32 %v249, %v249
    %v748 = vmul.f32 %v250, %v250
    %v749 = vmul.f32 %v251, %v251
    %v750 = vmul.f32 %v252, %v252
    %v751 = vmul.f32 %v253, %v253
    %v752 = vmul.f32 %v254, %v254
    %v753 = vmul.f32 %v255, %v255
    %v754 = vmul.f32 %v256, %v256
    %v755 = vmul.f32 %v257, %v257
    %v756 = vmul.f32 %v258, %v258
    %v757 = vmul.f32 %v259, %v259
    %v758 = vmul.f32 %v260, %v260
    %v759 = vmul.f32 %v261, %v261
    %v760 = vmul.f32 %v262, %v262
    %v761 = vmul.f32 %v263, %v263
    %v762 = vmul.f32 %v264, %v264
    %v763 = vmul.f32 %v265, %v265
    %v764 = vmul.f32 %v266, %v266
    %v765 = vmul.f32 %v267, %v267
    %v766 = vmul.f32 %v268, %v268
    %v767 = vmul.f32 %v269, %v269
    %v768 = vmul.f32 %v270, %v270
    %v769 = vmul.f32 %v271, %v271
    %v770 = vmul.f32 %v272, %v272
    %v771 = vmul.f32 %v273, %v273
    %v772 = vmul.f32 %v274, %v274
    %v773 = vmul.f32 %v275, %v275
    %v774 = vmul.f32 %v276, %v276
    %v775 = vmul.f32 %v277, %v277
    %v776 = vmul.f32 %v278, %v278
    %v777 = vmul.f32 %v279, %v279
    %v778 = vmul.f32 %v280, %v280
    %v779 = vmul.f32 %v281, %v281
    %v780 = vmul.f32 %v282, %v282
    %v781 = vmul.f32 %v283, %v283
    %v782 = vmul.f32 %v284, %v284
    %v783 = vmul.f32 %v285, %v285
    %v784 = vmul.f32 %v286, %v286
    %v785 = vmul.f32 %v287, %v287
    %v786 = vmul.f32 %v288, %v288
    %v787 = vmul.f32 %v289, %v289
    %v788 = vmul.f32 %v290, %v290
    %v789 = vadd.f32 %v539, %v541
    %v790 = vadd.f32 %v789, %v543
    %v791 = vadd.f32 %v790, %v545
    %v792 = vadd.f32 %v791, %v547
    %v793 = vadd.f32 %v792, %v549
    %v794 = vadd.f32 %v793, %v551
    %v795 = vadd.f32 %v794, %v553
    %v796 = vadd.f32 %v795, %v555
    %v797 = vadd.f32 %v796, %v557
    %v798 = vadd.f32 %v797, %v559
    %v799 = vadd.f32 %v798, %v561
    %v800 = vadd.f32 %v799, %v563
    %v801 = vadd.f32 %v800, %v565
    %v802 = vadd.f32 %v801, %v567
    %v803 = vadd.f32 %v802, %v569
    %v804 = vadd.f32 %v803, %v571
    %v805 = vadd.f32 %v804, %v573
    %v806 = vadd.f32 %v805, %v575
    %v807 = vadd.f32 %v806, %v577
    %v808 = vadd.f32 %v807, %v579
    %v809 = vadd.f32 %v808, %v581
    %v810 = vadd.f32 %v809, %v583
    %v811 = vadd.f32 %v810, %v585
    %v812 = vadd.f32 %v811, %v587
    %v813 = vadd.f32 %v812, %v589
    %v814 = vadd.f32 %v813, %v591
    %v815 = vadd.f32 %v814, %v593
    %v816 = vadd.f32 %v815, %v595
    %v817 = vadd.f32 %v816, %v597
    %v818 = vadd.f32 %v817, %v599
    %v819 = vadd.f32 %v818, %v601
    %v820 = vadd.f32 %v819, %v603
    %v821 = vadd.f32 %v820, %v605
    %v822 = vadd.f32 %v821, %v607
    %v823 = vadd.f32 %v822, %v609
    %v824 = vadd.f32 %v823, %v611
    %v825 = vadd.f32 %v824, %v613
    %v826 = vadd.f32 %v825, %v615
    %v827 = vadd.f32 %v826, %v617
    %v828 = vadd.f32 %v827, %v619
    %v829 = vadd.f32 %v828, %v621
    %v830 = vadd.f32 %v829, %v623
    %v831 = vadd.f32 %v830, %v625
    %v832 = vadd.f32 %v831, %v627
    %v833 = vadd.f32 %v832, %v629
    %v834 = vadd.f32 %v833, %v631
    %v835 = vadd.f32 %v834, %v633
    %v836 = vadd.f32 %v835, %v635
    %v837 = vadd.f32 %v836, %v637
    %v838 = vadd.f32 %v837, %v639
    %v839 = vadd.f32 %v838, %v641
    %v840 = vadd.f32 %v839, %v643
    %v841 = vadd.f32 %v840, %v645
    %v842 = vadd.f32 %v841, %v647
    %v843 = vadd.f32 %v842, %v649
    %v844 = vadd.f32 %v843, %v651
    %v845 = vadd.f32 %v844, %v653
    %v846 = vadd.f32 %v845, %v655
    %v847 = vadd.f32 %v846, %v657
    %v848 = vadd.f32 %v847, %v659
    %v849 = vadd.f32 %v848, %v661
    %v850 = vadd.f32 %v849, %v663
    %v851 = vadd.f32 %v850, %v665
    %v852 = vadd.f32 %v851, %v667
    %v853 = vadd.f32 %v852, %v669
    %v854 = vadd.f32 %v853, %v671
    %v855 = vadd.f32 %v854, %v673
    %v856 = vadd.f32 %v855, %v675
    %v857 = vadd.f32 %v856, %v677
    %v858 = vadd.f32 %v857, %v679
    %v859 = vadd.f32 %v858, %v681
    %v860 = vadd.f32 %v859, %v683
    %v861 = vadd.f32 %v860, %v685
    %v862 = vadd.f32 %v861, %v687
    %v863 = vadd.f32 %v862, %v689
    %v864 = vadd.f32 %v863, %v691
    %v865 = vadd.f32 %v864, %v693
    %v866 = vadd.f32 %v865, %v695
    %v867 = vadd.f32 %v866, %v697
    %v868 = vadd.f32 %v867, %v699
    %v869 = vadd.f32 %v868, %v701
    %v870 = vadd.f32 %v869, %v703
    %v871 = vadd.f32 %v870, %v705
    %v872 = vadd.f32 %v871, %v707
    %v873 = vadd.f32 %v872, %v709
    %v874 = vadd.f32 %v873, %v711
    %v875 = vadd.f32 %v874, %v713
    %v876 = vadd.f32 %v875, %v715
    %v877 = vadd.f32 %v876, %v717
    %v878 = vadd.f32 %v877, %v719
    %v879 = vadd.f32 %v878, %v721
    %v880 = vadd.f32 %v879, %v723
    %v881 = vadd.f32 %v880, %v725
    %v882 = vadd.f32 %v881, %v727
    %v883 = vadd.f32 %v882, %v729
    %v884 = vadd.f32 %v883, %v731
    %v885 = vadd.f32 %v884, %v733
    %v886 = vadd.f32 %v885, %v735
    %v887 = vadd.f32 %v886, %v737
    %v888 = vadd.f32 %v887, %v739
    %v889 = vadd.f32 %v888, %v741
    %v890 = vadd.f32 %v889, %v743
    %v891 = vadd.f32 %v890, %v745
    %v892 = vadd.f32 %v891, %v747
    %v893 = vadd.f32 %v892, %v749
    %v894 = vadd.f32 %v893, %v751
    %v895 = vadd.f32 %v894, %v753
    %v896 = vadd.f32 %v895, %v755
    %v897 = vadd.f32 %v896, %v757
    %v898 = vadd.f32 %v897, %v759
    %v899 = vadd.f32 %v898, %v761
    %v900 = vadd.f32 %v899, %v763
    %v901 = vadd.f32 %v900, %v765
    %v902 = vadd.f32 %v901, %v767
    %v903 = vadd.f32 %v902, %v769
    %v904 = vadd.f32 %v903, %v771
    %v905 = vadd.f32 %v904, %v773
    %v906 = vadd.f32 %v905, %v775
    %v907 = vadd.f32 %v906, %v777
    %v908 = vadd.f32 %v907, %v779
    %v909 = vadd.f32 %v908, %v781
    %v910 = vadd.f32 %v909, %v783
    %v911 = vadd.f32 %v910, %v785
    %v912 = vadd.f32 %v911, %v787
    %v913 = vadd.f32 %v540, %v542
    %v914 = vadd.f32 %v913, %v544
    %v915 = vadd.f32 %v914, %v546
    %v916 = vadd.f32 %v915, %v548
    %v917 = vadd.f32 %v916, %v550
    %v918 = vadd.f32 %v917, %v552
    %v919 = vadd.f32 %v918, %v554
    %v920 = vadd.f32 %v919, %v556
    %v921 = vadd.f32 %v920, %v558
    %v922 = vadd.f32 %v921, %v560
    %v923 = vadd.f32 %v922, %v562
    %v924 = vadd.f32 %v923, %v564
    %v925 = vadd.f32 %v924, %v566
    %v926 = vadd.f32 %v925, %v568
    %v927 = vadd.f32 %v926, %v570
    %v928 = vadd.f32 %v927, %v572
    %v929 = vadd.f32 %v928, %v574
    %v930 = vadd.f32 %v929, %v576
    %v931 = vadd.f32 %v930, %v578
    %v932 = vadd.f32 %v931, %v580
    %v933 = vadd.f32 %v932, %v582
    %v934 = vadd.f32 %v933, %v584
    %v935 = vadd.f32 %v934, %v586
    %v936 = vadd.f32 %v935, %v588
    %v937 = vadd.f32 %v936, %v590
    %v938 = vadd.f32 %v937, %v592
    %v939 = vadd.f32 %v938, %v594
    %v940 = vadd.f32 %v939, %v596
    %v941 = vadd.f32 %v940, %v598
    %v942 = vadd.f32 %v941, %v600
    %v943 = vadd.f32 %v942, %v602
    %v944 = vadd.f32 %v943, %v604
    %v945 = vadd.f32 %v944, %v606
    %v946 = vadd.f32 %v945, %v608
    %v947 = vadd.f32 %v946, %v610
    %v948 = vadd.f32 %v947, %v612
    %v949 = vadd.f32 %v948, %v614
    %v950 = vadd.f32 %v949, %v616
    %v951 = vadd.f32 %v950, %v618
    %v952 = vadd.f32 %v951, %v620
    %v953 = vadd.f32 %v952, %v622
    %v954 = vadd.f32 %v953, %v624
    %v955 = vadd.f32 %v954, %v626
    %v956 = vadd.f32 %v955, %v628
    %v957 = vadd.f32 %v956, %v630
    %v958 = vadd.f32 %v957, %v632
    %v959 = vadd.f32 %v958, %v634
    %v960 = vadd.f32 %v959, %v636
    %v961 = vadd.f32 %v960, %v638
    %v962 = vadd.f32 %v961, %v640
    %v963 = vadd.f32 %v962, %v642
    %v964 = vadd.f32 %v963, %v644
    %v965 = vadd.f32 %v964, %v646
    %v966 = vadd.f32 %v965, %v648
    %v967 = vadd.f32 %v966, %v650
    %v968 = vadd.f32 %v967, %v652
    %v969 = vadd.f32 %v968, %v654
    %v970 = vadd.f32 %v969, %v656
    %v971 = vadd.f32 %v970, %v658
    %v972 = vadd.f32 %v971, %v660
    %v973 = vadd.f32 %v972, %v662
    %v974 = vadd.f32 %v973, %v664
    %v975 = vadd.f32 %v974, %v666
    %v976 = vadd.f32 %v975, %v668
    %v977 = vadd.f32 %v976, %v670
    %v978 = vadd.f32 %v977, %v672
    %v979 = vadd.f32 %v978, %v674
    %v980 = vadd.f32 %v979, %v676
    %v981 = vadd.f32 %v980, %v678
    %v982 = vadd.f32 %v981, %v680
    %v983 = vadd.f32 %v982, %v682
    %v984 = vadd.f32 %v983, %v684
    %v985 = vadd.f32 %v984, %v686
    %v986 = vadd.f32 %v985, %v688
    %v987 = vadd.f32 %v986, %v690
    %v988 = vadd.f32 %v987, %v692
    %v989 = vadd.f32 %v988, %v694
    %v990 = vadd.f32 %v989, %v696
    %v991 = vadd.f32 %v990, %v698
    %v992 = vadd.f32 %v991, %v700
    %v993 = vadd.f32 %v992, %v702
    %v994 = vadd.f32 %v993, %v704
    %v995 = vadd.f32 %v994, %v706
    %v996 = vadd.f32 %v995, %v708
    %v997 = vadd.f32 %v996, %v710
    %v998 = vadd.f32 %v997, %v712
    %v999 = vadd.f32 %v998, %v714
    %v1000 = vadd.f32 %v999, %v716
    %v1001 = vadd.f32 %v1000, %v718
    %v1002 = vadd.f32 %v1001, %v720
    %v1003 = vadd.f32 %v1002, %v722
    %v1004 = vadd.f32 %v1003, %v724
    %v1005 = vadd.f32 %v1004, %v726
    %v1006 = vadd.f32 %v1005, %v728
    %v1007 = vadd.f32 %v1006, %v730
    %v1008 = vadd.f32 %v1007, %v732
    %v1009 = vadd.f32 %v1008, %v734
    %v1010 = vadd.f32 %v1009, %v736
    %v1011 = vadd.f32 %v1010, %v738
    %v1012 = vadd.f32 %v1011, %v740
    %v1013 = vadd.f32 %v1012, %v742
    %v1014 = vadd.f32 %v1013, %v744
    %v1015 = vadd.f32 %v1014, %v746
    %v1016 = vadd.f32 %v1015, %v748
    %v1017 = vadd.f32 %v1016, %v750
    %v1018 = vadd.f32 %v1017, %v752
    %v1019 = vadd.f32 %v1018, %v754
    %v1020 = vadd.f32 %v1019, %v756
    %v1021 = vadd.f32 %v1020, %v758
    %v1022 = vadd.f32 %v1021, %v760
    %v1023 = vadd.f32 %v1022, %v762
    %v1024 = vadd.f32 %v1023, %v764
    %v1025 = vadd.f32 %v1024, %v766
    %v1026 = vadd.f32 %v1025, %v768
    %v1027 = vadd.f32 %v1026, %v770
    %v1028 = vadd.f32 %v1027, %v772
    %v1029 = vadd.f32 %v1028, %v774
    %v1030 = vadd.f32 %v1029, %v776
    %v1031 = vadd.f32 %v1030, %v778
    %v1032 = vadd.f32 %v1031, %v780
    %v1033 = vadd.f32 %v1032, %v782
    %v1034 = vadd.f32 %v1033, %v784
    %v1035 = vadd.f32 %v1034, %v786
    %v1036 = vadd.f32 %v1035, %v788
    %v1037 = vld [vmem:[#allocation5] sm:$0xff]
    %v1038 = vld [vmem:[#allocation5 + $0x8] sm:$0xff]
    %v1039 = vadd.f32 %v1037, %v414
    %v1040 = vadd.f32 %v1038, %v538
    %1041 = vst [vmem:[#allocation5] sm:$0xff] %v1039
    %1042 = vst [vmem:[#allocation5 + $0x8] sm:$0xff] %v1040
    %v1043 = vld [vmem:[#allocation6] sm:$0xff]
    %v1044 = vld [vmem:[#allocation6 + $0x8] sm:$0xff]
    %v1045 = vadd.f32 %v1043, %v912
    %v1046 = vadd.f32 %v1044, %v1036
    %1047 = vst [vmem:[#allocation6] sm:$0xff] %v1045
    %1048 = vst [vmem:[#allocation6 + $0x8] sm:$0xff] %v1046
    // Predicated region
    $region14: #{tpu_custom_call.1} parent=1 // pred_check
      _
    $region15: #{tpu_custom_call.1} parent=1 // pred_check_branch
      %1050 = sbr.rel (0) target = $region17
    $region16: #{tpu_custom_call.1} parent=1 // pred_region
      %s1052 = ssub.s32 256, 256
      %1053 = vsyncadd [#allocation4], %s1052
      %s1055 = sshll.u32 [#allocation5], 4
      %s1056 = int_to_ptr.vmem [resolvable:$true] %s1055
      %1058 = dma.vmem_to_hbm [thread:$0]  %s1056, 256, %s1, [#allocation4]
    $region17: #{tpu_custom_call.1} parent=1 // pred_fallthru
      _
    // Predicated region
    $region18: #{tpu_custom_call.1} parent=1 // pred_check
      _
    $region19: #{tpu_custom_call.1} parent=1 // pred_check_branch
      %1060 = sbr.rel (0) target = $region21
    $region20: #{tpu_custom_call.1} parent=1 // pred_region
      %s1062 = ssub.s32 256, 256
      %1063 = vsyncadd [#allocation7], %s1062
      %s1065 = sshll.u32 [#allocation6], 4
      %s1066 = int_to_ptr.vmem [resolvable:$true] %s1065
      %1068 = dma.vmem_to_hbm [thread:$0]  %s1066, 256, %s2, [#allocation7]
    $region21: #{tpu_custom_call.1} parent=1 // pred_fallthru
      _
    // Predicated region
    $region22: #{tpu_custom_call.1} parent=1 // pred_check
      _
    $region23: #{tpu_custom_call.1} parent=1 // pred_check_branch
      %1070 = sbr.rel (0) target = $region25
    $region24: #{tpu_custom_call.1} parent=1 // pred_region
      %1071 = dma.done [#allocation4], 256
    $region25: #{tpu_custom_call.1} parent=1 // pred_fallthru
      _
    // Predicated region
    $region26: #{tpu_custom_call.1} parent=1 // pred_check
      _
    $region27: #{tpu_custom_call.1} parent=1 // pred_check_branch
      %1073 = sbr.rel (0) target = $region29
    $region28: #{tpu_custom_call.1} parent=1 // pred_region
      %1074 = dma.done [#allocation7], 256
    $region29: #{tpu_custom_call.1} parent=1 // pred_fallthru
      _
    %1075 = vsyncpa [#allocation3], 1
    %1076 = vsyncpa [#allocation4], 1
    %1077 = vsyncpa [#allocation7], 1

</llo_original>
